<compile_context>
chip_gen: v6e
topology: v6e:2x2x1
jax: 0.10.0
libtpu: 0.0.40
codegen_flags: <defaults>
</compile_context>

<pallas_src>
import functools

import jax
import jax.numpy as jnp
import numpy as np
from jax import lax
from jax.experimental import pallas as pl
from jax.experimental.pallas import tpu as pltpu


def _round_up(x, m):
    return ((x + m - 1) // m) * m


def _phase_taps(r, pad, k, s):
    """Taps of output phase r (r = oh mod s) for a 1-D transposed conv.

    Returns [(kernel_index, input_shift)]: output position oh = s*q + r reads x[q + shift]
    through kernel tap kernel_index.
    """
    taps = []
    for kk in range(k):
        t = r + pad - kk
        if t % s == 0:
            taps.append((kk, t // s))
    return taps


# ----------------------------------------------------------------------------
# Fused Pallas kernel: polyphase conv + BN batch stats + BN affine + ReLU.
# ----------------------------------------------------------------------------
def _fused_tconv_bn_relu_kernel(xs_ref, w_ref, g_ref, b_ref, out_ref,
                                s1_ref, s2_ref, *, n_batch, n_phase, c_out,
                                count, eps):
    """One grid step per batch element (grid axis is 'arbitrary').

    xs_ref : (1, Kd, Sp)            bf16  stacked shifted input (spatial on lanes)
    w_ref  : (n_phase*Cout, Kd)     bf16  stacked polyphase weights
    g_ref  : (Cout, 1)              f32   BatchNorm gamma
    b_ref  : (Cout, 1)              f32   BatchNorm beta
    out_ref: (N, n_phase*Cout, Sp)  f32   VMEM-resident output slab (flushed once at end)
    s1_ref : (n_phase*Cout, 1)      f32   per-row running sum        (scratch)
    s2_ref : (n_phase*Cout, 1)      f32   per-row running sum-of-sq  (scratch)
    """
    n = pl.program_id(0)

    @pl.when(n == 0)
    def _init():
        s1_ref[...] = jnp.zeros_like(s1_ref)
        s2_ref[...] = jnp.zeros_like(s2_ref)

    # One MXU contraction: all output phases and all taps folded into (n_phase*Cout, Kd).
    conv = jnp.dot(w_ref[...], xs_ref[0], preferred_element_type=jnp.float32)

    # Stash this batch element's conv result in the VMEM-resident output slab.
    out_ref[n] = conv

    # Batch statistics (no bias, zero-padded lanes => padding contributes exactly 0).
    s1_ref[...] += jnp.sum(conv, axis=1, keepdims=True)
    s2_ref[...] += jnp.sum(conv * conv, axis=1, keepdims=True)

    @pl.when(n == n_batch - 1)
    def _finalize():
        # Combine the n_phase row-blocks into per-channel batch statistics.
        s1 = s1_ref[0:c_out, :]
        s2 = s2_ref[0:c_out, :]
        for p in range(1, n_phase):
            s1 = s1 + s1_ref[p * c_out:(p + 1) * c_out, :]
            s2 = s2 + s2_ref[p * c_out:(p + 1) * c_out, :]
        inv_n = 1.0 / count
        mean = s1 * inv_n
        var = jnp.maximum(s2 * inv_n - mean * mean, 0.0)
        scale = g_ref[...] * lax.rsqrt(var + eps)      # conv bias cancels under BN
        shift = b_ref[...] - mean * scale
        scale_r = jnp.concatenate([scale] * n_phase, axis=0)[None]   # (1, nP*Cout, 1)
        shift_r = jnp.concatenate([shift] * n_phase, axis=0)[None]
        out_ref[...] = jnp.maximum(out_ref[...] * scale_r + shift_r, 0.0)


# ----------------------------------------------------------------------------
# Wrapper: polyphase lowering glue + single fused pallas_call + output assembly.
# ----------------------------------------------------------------------------
def base_transpose_conv_block(
    x_nchw,
    weight_t,       # (Cin, Cout, KH, KW)  -- PyTorch ConvTranspose2d weight layout
    bias,           # (Cout,)  (unused: cancels exactly under training-mode BatchNorm)
    gamma,          # (Cout,)  BatchNorm weight
    beta,           # (Cout,)  BatchNorm bias
    *,
    stride=(2, 2),
    padding=1,
    output_padding=1,
    scale_factor=1,
    bn_eps=1e-5,
):
    del bias  # ConvTranspose2d bias followed by training-mode BatchNorm cancels exactly.

    N, Cin, H, W = x_nchw.shape
    _, Cout, KH, KW = weight_t.shape
    sh, sw = stride

    OH = (H - 1) * sh - 2 * padding + KH + output_padding
    OW = (W - 1) * sw - 2 * padding + KW + output_padding
    if OH != sh * H or OW != sw * W:
        # TODO(synk): non size-doubling geometries need per-phase row counts; fall back to
        # a tiled two-pass formulation for those.
        raise NotImplementedError("polyphase path assumes OH == sh*H and OW == sw*W")

    taps_h = [_phase_taps(r, padding, KH, sh) for r in range(sh)]
    taps_w = [_phase_taps(r, padding, KW, sw) for r in range(sw)]
    shifts_h = sorted({d for taps in taps_h for _, d in taps})
    shifts_w = sorted({d for taps in taps_w for _, d in taps})
    if min(shifts_h) < 0 or min(shifts_w) < 0:
        raise NotImplementedError("negative input shifts (padding >= stride + ...) unsupported")
    dmax_h, dmax_w = max(shifts_h), max(shifts_w)
    shifts = [(dh, dw) for dh in shifts_h for dw in shifts_w]
    phases = [(rh, rw) for rh in range(sh) for rw in range(sw)]
    nD, nP = len(shifts), len(phases)
    Kd = nD * Cin                  # folded contraction depth (16 here, was 36)
    S_half = H * W                 # spatial positions per phase (lane axis)
    Sp = _round_up(S_half, 128)

    resident_bytes = N * nP * Cout * Sp * 4
    if resident_bytes > 24 * 1024 * 1024:
        # TODO(synk): for conv outputs too large to keep VMEM-resident, tile the spatial
        # axis and split stats/apply into two passes with a bf16 intermediate.
        raise NotImplementedError("conv output too large for the fused VMEM-resident path")

    # ---- single fused XLA producer: pad + shifted slices + concat -> (N, Kd, Sp) bf16 ----
    xp = jnp.pad(x_nchw.astype(jnp.float32),
                 ((0, 0), (0, 0), (0, dmax_h), (0, dmax_w)))
    xs = jnp.concatenate([xp[:, :, dh:dh + H, dw:dw + W] for dh, dw in shifts], axis=1)
    xs = xs.reshape(N, Kd, S_half).astype(jnp.bfloat16)
    xs = jnp.pad(xs, ((0, 0), (0, 0), (0, Sp - S_half)))

    # ---- stacked polyphase weight (nP*Cout, Kd), bf16 (tiny, built once) ----
    wst = jnp.zeros((nP * Cout, Kd), jnp.float32)
    for pi, (rh, rw) in enumerate(phases):
        for kh, dh in taps_h[rh]:
            for kw, dw in taps_w[rw]:
                ci = shifts.index((dh, dw))
                blk = jnp.transpose(weight_t[:, :, kh, kw]).astype(jnp.float32)  # (Cout, Cin)
                wst = wst.at[pi * Cout:(pi + 1) * Cout,
                             ci * Cin:(ci + 1) * Cin].set(blk)
    wst = wst.astype(jnp.bfloat16)

    g2 = gamma.reshape(Cout, 1).astype(jnp.float32)
    b2 = beta.reshape(Cout, 1).astype(jnp.float32)

    out_phase = pl.pallas_call(
        functools.partial(
            _fused_tconv_bn_relu_kernel, n_batch=N, n_phase=nP, c_out=Cout,
            count=float(N * OH * OW), eps=float(bn_eps)),
        out_shape=jax.ShapeDtypeStruct((N, nP * Cout, Sp), jnp.float32),
        grid=(N,),
        in_specs=[
            pl.BlockSpec((1, Kd, Sp), lambda n: (n, 0, 0)),
            pl.BlockSpec((nP * Cout, Kd), lambda n: (0, 0)),
            pl.BlockSpec((Cout, 1), lambda n: (0, 0)),
            pl.BlockSpec((Cout, 1), lambda n: (0, 0)),
        ],
        out_specs=pl.BlockSpec((N, nP * Cout, Sp), lambda n: (0, 0, 0)),
        scratch_shapes=[pltpu.VMEM((nP * Cout, 1), jnp.float32),
                        pltpu.VMEM((nP * Cout, 1), jnp.float32)],
        compiler_params=pltpu.CompilerParams(
            dimension_semantics=("arbitrary",),
            vmem_limit_bytes=32 * 1024 * 1024),
        cost_estimate=pl.CostEstimate(
            flops=2 * N * (nP * Cout) * Kd * Sp,
            transcendentals=0,
            bytes_accessed=(xs.size * 2 + wst.size * 2 + 2 * Cout * 4
                            + N * nP * Cout * Sp * 4)),
    )(xs, wst, g2, b2)

    # ---- XLA tail: one fused copy = phase interleave + nearest-upsample replication ----
    # TODO(synk): writing the interleaved/upsampled layout directly from the kernel would
    # need period-sf lane/sublane interleaving stores that the output index_map can't
    # express cleanly; it stays as a single fused XLA copy.
    y = out_phase[:, :, :S_half].reshape(N, sh, sw, Cout, H, W)
    y = jnp.transpose(y, (0, 3, 4, 1, 5, 2)).reshape(N, Cout, OH, OW)
    sf = int(scale_factor)
    if sf != 1:
        y = jnp.broadcast_to(y[:, :, :, None, :, None],
                             (N, Cout, OH, sf, OW, sf)).reshape(N, Cout, OH * sf, OW * sf)
    return y


# ----------------------------------------------------------------------------
# Pure-JAX reference (independent dilate+pad+flip-conv path, same bf16 matmul inputs).
# ----------------------------------------------------------------------------
def _reference(x_nchw, weight_t, bias, gamma, beta, *, stride, padding,
               output_padding, scale_factor, bn_eps=1e-5):
    N, Cin, H, W = x_nchw.shape
    _, Cout, KH, KW = weight_t.shape
    sh, sw = stride
    OH = (H - 1) * sh - 2 * padding + KH + output_padding
    OW = (W - 1) * sw - 2 * padding + KW + output_padding
    x = jnp.transpose(x_nchw, (0, 2, 3, 1)).astype(jnp.float32)
    Hd, Wd = (H - 1) * sh + 1, (W - 1) * sw + 1
    xd = jnp.zeros((N, Hd, Wd, Cin), jnp.float32).at[:, ::sh, ::sw, :].set(x)
    ph0, pw0 = KH - 1 - padding, KW - 1 - padding
    xpad = jnp.pad(xd, ((0, 0), (ph0, ph0 + output_padding),
                        (pw0, pw0 + output_padding), (0, 0)))
    w_flip = jnp.transpose(weight_t[:, :, ::-1, ::-1], (2, 3, 0, 1)).astype(jnp.bfloat16)
    xpad_b = xpad.astype(jnp.bfloat16)
    acc = jnp.zeros((N, OH, OW, Cout), jnp.float32)
    for i in range(KH):
        for j in range(KW):
            acc = acc + jnp.einsum("nhwc,cd->nhwd",
                                   xpad_b[:, i:i + OH, j:j + OW, :], w_flip[i, j],
                                   preferred_element_type=jnp.float32)
    acc = acc + bias.reshape(1, 1, 1, Cout)
    sf = int(scale_factor)
    if sf != 1:
        acc = jnp.repeat(jnp.repeat(acc, sf, axis=1), sf, axis=2)
    mean = jnp.mean(acc, axis=(0, 1, 2), keepdims=True)
    var = jnp.mean(jnp.square(acc - mean), axis=(0, 1, 2), keepdims=True)
    y = (acc - mean) * lax.rsqrt(var + bn_eps) * gamma.reshape(1, 1, 1, -1) + \
        beta.reshape(1, 1, 1, -1)
    y = jnp.maximum(y, 0.0)
    return jnp.transpose(y, (0, 3, 1, 2))


# ----------------------------------------------------------------------------
if __name__ == "__main__":
    # Module hyperparameters (small, consistent with the PyTorch __init__).
    N, Cin, H, W = 2, 4, 16, 16
    Cout = 8
    kernel_size = (3, 3)
    stride = (2, 2)
    padding = 1
    output_padding = 1       # hard-coded in the module
    scale_factor = 2         # kwargs['scale_factor'] when upsample=True

    key = jax.random.PRNGKey(0)
    kx, kw, kb = jax.random.split(key, 3)

    x = jax.random.normal(kx, (N, Cin, H, W), dtype=jnp.float32)

    # ConvTranspose2d weight: (Cin, Cout, KH, KW); kaiming_normal_ (fan_in mode):
    # fan_in = weight.size(1) * KH * KW = Cout * KH * KW
    fan_in = Cout * kernel_size[0] * kernel_size[1]
    std = float(np.sqrt(2.0 / fan_in))
    weight_t = std * jax.random.normal(
        kw, (Cin, Cout, kernel_size[0], kernel_size[1]), dtype=jnp.float32)
    bound = float(1.0 / np.sqrt(fan_in))
    bias = jax.random.uniform(kb, (Cout,), jnp.float32, -bound, bound)

    # BatchNorm2d affine params at init: gamma=1, beta=0.
    gamma = jnp.ones((Cout,), jnp.float32)
    beta = jnp.zeros((Cout,), jnp.float32)

    fwd = jax.jit(functools.partial(
        base_transpose_conv_block,
        stride=stride, padding=padding, output_padding=output_padding,
        scale_factor=scale_factor))
    out = jax.block_until_ready(fwd(x, weight_t, bias, gamma, beta))

    ref = jax.block_until_ready(_reference(
        x, weight_t, bias, gamma, beta,
        stride=stride, padding=padding, output_padding=output_padding,
        scale_factor=scale_factor))

    # Expected output spatial: ((16-1)*2 - 2 + 3 + 1) * 2 = 64
    assert out.shape == (N, Cout, 64, 64), out.shape
    np.testing.assert_allclose(np.asarray(out), np.asarray(ref), atol=1e-3, rtol=1e-3)

    print("KERNEL_OK")
</pallas_src>

<mosaic_0001>
module attributes {stable_mosaic.version = 11 : i64} {
  func.func @_fused_tconv_bn_relu_kernel(%arg0: i32, %arg1: memref<1x16x256xbf16, #tpu.memory_space<vmem>>, %arg2: memref<32x16xbf16, #tpu.memory_space<vmem>>, %arg3: memref<8x1xf32, #tpu.memory_space<vmem>>, %arg4: memref<8x1xf32, #tpu.memory_space<vmem>>, %arg5: memref<2x32x256xf32, #tpu.memory_space<vmem>>, %arg6: memref<32x1xf32, #tpu.memory_space<vmem>>, %arg7: memref<32x1xf32, #tpu.memory_space<vmem>>) attributes {dimension_semantics = [#tpu.dimension_semantics<arbitrary>], iteration_bounds = array<i64: 2>, scalar_prefetch = 0 : i64, scratch_operands = 2 : i64, tpu.core_type = #tpu.core_type<tc>, window_params = [{transform_indices = @transform_0, window_bounds = array<i64: 1, 16, 256>}, {pipeline_mode = #tpu.pipeline_mode<synchronous>, transform_indices = @transform_1, window_bounds = array<i64: 32, 16>}, {pipeline_mode = #tpu.pipeline_mode<synchronous>, transform_indices = @transform_2, window_bounds = array<i64: 8, 1>}, {pipeline_mode = #tpu.pipeline_mode<synchronous>, transform_indices = @transform_3, window_bounds = array<i64: 8, 1>}, {pipeline_mode = #tpu.pipeline_mode<synchronous>, transform_indices = @transform_4, window_bounds = array<i64: 2, 32, 256>}]} {
    %c0_i32 = arith.constant 0 : i32
    %0 = arith.cmpi eq, %arg0, %c0_i32 : i32
    %1 = arith.extui %0 : i1 to i32
    %c0_i32_0 = arith.constant 0 : i32
    %2 = arith.cmpi ne, %1, %c0_i32_0 : i32
    scf.if %2 {
      %cst_18 = arith.constant 0.000000e+00 : f32
      %25 = vector.broadcast %cst_18 : f32 to vector<32x1xf32>
      %c0_19 = arith.constant 0 : index
      %c0_20 = arith.constant 0 : index
      %26 = vector.load %arg6[%c0_19, %c0_20] : memref<32x1xf32, #tpu.memory_space<vmem>>, vector<32x1xf32>
      tpu.vector_store %arg6[%c0_19, %c0_20], %25 {strides = array<i32>} : memref<32x1xf32, #tpu.memory_space<vmem>>, vector<32x1xf32>,
      %cst_21 = arith.constant 0.000000e+00 : f32
      %27 = vector.broadcast %cst_21 : f32 to vector<32x1xf32>
      %c0_22 = arith.constant 0 : index
      %c0_23 = arith.constant 0 : index
      %28 = vector.load %arg7[%c0_22, %c0_23] : memref<32x1xf32, #tpu.memory_space<vmem>>, vector<32x1xf32>
      tpu.vector_store %arg7[%c0_22, %c0_23], %27 {strides = array<i32>} : memref<32x1xf32, #tpu.memory_space<vmem>>, vector<32x1xf32>,
    } else {
    }
    %c0 = arith.constant 0 : index
    %c0_1 = arith.constant 0 : index
    %3 = vector.load %arg2[%c0, %c0_1] : memref<32x16xbf16, #tpu.memory_space<vmem>>, vector<32x16xbf16>
    %c0_2 = arith.constant 0 : index
    %c0_3 = arith.constant 0 : index
    %c0_4 = arith.constant 0 : index
    %4 = vector.load %arg1[%c0_2, %c0_3, %c0_4] : memref<1x16x256xbf16, #tpu.memory_space<vmem>>, vector<1x16x256xbf16>
    %5 = vector.shape_cast %4 : vector<1x16x256xbf16> to vector<16x256xbf16>
    %cst = arith.constant dense<0.000000e+00> : vector<32x256xf32>
    %6 = tpu.matmul %3, %5, %cst {dimension_numbers = #tpu.dot_dimension_numbers<[1], [0], [0], [1], [0, 0, 1, 1], [], []>} : vector<32x16xbf16>, vector<16x256xbf16>, vector<32x256xf32> -> vector<32x256xf32>
    %7 = arith.index_cast %arg0 : i32 to index
    %c0_5 = arith.constant 0 : index
    %c0_6 = arith.constant 0 : index
    %8 = vector.load %arg5[%7, %c0_5, %c0_6] : memref<2x32x256xf32, #tpu.memory_space<vmem>>, vector<1x32x256xf32>
    %9 = vector.shape_cast %8 : vector<1x32x256xf32> to vector<32x256xf32>
    %10 = vector.shape_cast %6 : vector<32x256xf32> to vector<1x32x256xf32>
    tpu.vector_store %arg5[%7, %c0_5, %c0_6], %10 {strides = array<i32>} : memref<2x32x256xf32, #tpu.memory_space<vmem>>, vector<1x32x256xf32>,
    %c0_7 = arith.constant 0 : index
    %c0_8 = arith.constant 0 : index
    %11 = vector.load %arg6[%c0_7, %c0_8] : memref<32x1xf32, #tpu.memory_space<vmem>>, vector<32x1xf32>
    %cst_9 = arith.constant dense<0.000000e+00> : vector<32xf32>
    %12 = vector.multi_reduction <add>, %6, %cst_9 [1] : vector<32x256xf32> to vector<32xf32>
    %13 = vector.shape_cast %12 : vector<32xf32> to vector<32x1xf32>
    %14 = arith.addf %11, %13 : vector<32x1xf32>
    %c0_10 = arith.constant 0 : index
    %c0_11 = arith.constant 0 : index
    %15 = vector.load %arg6[%c0_10, %c0_11] : memref<32x1xf32, #tpu.memory_space<vmem>>, vector<32x1xf32>
    tpu.vector_store %arg6[%c0_10, %c0_11], %14 {strides = array<i32>} : memref<32x1xf32, #tpu.memory_space<vmem>>, vector<32x1xf32>,
    %c0_12 = arith.constant 0 : index
    %c0_13 = arith.constant 0 : index
    %16 = vector.load %arg7[%c0_12, %c0_13] : memref<32x1xf32, #tpu.memory_space<vmem>>, vector<32x1xf32>
    %17 = arith.mulf %6, %6 : vector<32x256xf32>
    %cst_14 = arith.constant dense<0.000000e+00> : vector<32xf32>
    %18 = vector.multi_reduction <add>, %17, %cst_14 [1] : vector<32x256xf32> to vector<32xf32>
    %19 = vector.shape_cast %18 : vector<32xf32> to vector<32x1xf32>
    %20 = arith.addf %16, %19 : vector<32x1xf32>
    %c0_15 = arith.constant 0 : index
    %c0_16 = arith.constant 0 : index
    %21 = vector.load %arg7[%c0_15, %c0_16] : memref<32x1xf32, #tpu.memory_space<vmem>>, vector<32x1xf32>
    tpu.vector_store %arg7[%c0_15, %c0_16], %20 {strides = array<i32>} : memref<32x1xf32, #tpu.memory_space<vmem>>, vector<32x1xf32>,
    %c1_i32 = arith.constant 1 : i32
    %22 = arith.cmpi eq, %arg0, %c1_i32 : i32
    %23 = arith.extui %22 : i1 to i32
    %c0_i32_17 = arith.constant 0 : i32
    %24 = arith.cmpi ne, %23, %c0_i32_17 : i32
    scf.if %24 {
      %c0_18 = arith.constant 0 : index
      %c0_19 = arith.constant 0 : index
      %25 = vector.load %arg6[%c0_18, %c0_19] : memref<32x1xf32, #tpu.memory_space<vmem>>, vector<8x1xf32>
      %c0_20 = arith.constant 0 : index
      %c0_21 = arith.constant 0 : index
      %26 = vector.load %arg7[%c0_20, %c0_21] : memref<32x1xf32, #tpu.memory_space<vmem>>, vector<8x1xf32>
      %c8 = arith.constant 8 : index
      %c0_22 = arith.constant 0 : index
      %27 = vector.load %arg6[%c8, %c0_22] : memref<32x1xf32, #tpu.memory_space<vmem>>, vector<8x1xf32>
      %28 = arith.addf %25, %27 : vector<8x1xf32>
      %c8_23 = arith.constant 8 : index
      %c0_24 = arith.constant 0 : index
      %29 = vector.load %arg7[%c8_23, %c0_24] : memref<32x1xf32, #tpu.memory_space<vmem>>, vector<8x1xf32>
      %30 = arith.addf %26, %29 : vector<8x1xf32>
      %c16 = arith.constant 16 : index
      %c0_25 = arith.constant 0 : index
      %31 = vector.load %arg6[%c16, %c0_25] : memref<32x1xf32, #tpu.memory_space<vmem>>, vector<8x1xf32>
      %32 = arith.addf %28, %31 : vector<8x1xf32>
      %c16_26 = arith.constant 16 : index
      %c0_27 = arith.constant 0 : index
      %33 = vector.load %arg7[%c16_26, %c0_27] : memref<32x1xf32, #tpu.memory_space<vmem>>, vector<8x1xf32>
      %34 = arith.addf %30, %33 : vector<8x1xf32>
      %c24 = arith.constant 24 : index
      %c0_28 = arith.constant 0 : index
      %35 = vector.load %arg6[%c24, %c0_28] : memref<32x1xf32, #tpu.memory_space<vmem>>, vector<8x1xf32>
      %36 = arith.addf %32, %35 : vector<8x1xf32>
      %c24_29 = arith.constant 24 : index
      %c0_30 = arith.constant 0 : index
      %37 = vector.load %arg7[%c24_29, %c0_30] : memref<32x1xf32, #tpu.memory_space<vmem>>, vector<8x1xf32>
      %38 = arith.addf %34, %37 : vector<8x1xf32>
      %cst_31 = arith.constant 4.8828125E-4 : f32
      %39 = vector.broadcast %cst_31 : f32 to vector<8x1xf32>
      %40 = arith.mulf %36, %39 : vector<8x1xf32>
      %cst_32 = arith.constant 4.8828125E-4 : f32
      %41 = vector.broadcast %cst_32 : f32 to vector<8x1xf32>
      %42 = arith.mulf %38, %41 : vector<8x1xf32>
      %43 = arith.mulf %40, %40 : vector<8x1xf32>
      %44 = arith.subf %42, %43 : vector<8x1xf32>
      %cst_33 = arith.constant 0.000000e+00 : f32
      %45 = vector.broadcast %cst_33 : f32 to vector<8x1xf32>
      %46 = arith.maximumf %44, %45 : vector<8x1xf32>
      %c0_34 = arith.constant 0 : index
      %c0_35 = arith.constant 0 : index
      %47 = vector.load %arg3[%c0_34, %c0_35] : memref<8x1xf32, #tpu.memory_space<vmem>>, vector<8x1xf32>
      %cst_36 = arith.constant 9.99999974E-6 : f32
      %48 = vector.broadcast %cst_36 : f32 to vector<8x1xf32>
      %49 = arith.addf %46, %48 : vector<8x1xf32>
      %50 = math.rsqrt %49 : vector<8x1xf32>
      %51 = arith.mulf %47, %50 : vector<8x1xf32>
      %c0_37 = arith.constant 0 : index
      %c0_38 = arith.constant 0 : index
      %52 = vector.load %arg4[%c0_37, %c0_38] : memref<8x1xf32, #tpu.memory_space<vmem>>, vector<8x1xf32>
      %53 = arith.mulf %40, %51 : vector<8x1xf32>
      %54 = arith.subf %52, %53 : vector<8x1xf32>
      %55 = tpu.concatenate %51, %51, %51, %51 in 0 : vector<8x1xf32>, vector<8x1xf32>, vector<8x1xf32>, vector<8x1xf32> -> vector<32x1xf32>
      %56 = vector.shape_cast %55 : vector<32x1xf32> to vector<1x32x1xf32>
      %57 = tpu.concatenate %54, %54, %54, %54 in 0 : vector<8x1xf32>, vector<8x1xf32>, vector<8x1xf32>, vector<8x1xf32> -> vector<32x1xf32>
      %58 = vector.shape_cast %57 : vector<32x1xf32> to vector<1x32x1xf32>
      %c0_39 = arith.constant 0 : index
      %c0_40 = arith.constant 0 : index
      %c0_41 = arith.constant 0 : index
      %59 = vector.load %arg5[%c0_39, %c0_40, %c0_41] : memref<2x32x256xf32, #tpu.memory_space<vmem>>, vector<2x32x256xf32>
      %60 = vector.broadcast %56 : vector<1x32x1xf32> to vector<2x32x256xf32>
      %61 = arith.mulf %59, %60 : vector<2x32x256xf32>
      %62 = vector.broadcast %58 : vector<1x32x1xf32> to vector<2x32x256xf32>
      %63 = arith.addf %61, %62 : vector<2x32x256xf32>
      %cst_42 = arith.constant 0.000000e+00 : f32
      %64 = vector.broadcast %cst_42 : f32 to vector<2x32x256xf32>
      %65 = arith.maximumf %63, %64 : vector<2x32x256xf32>
      %c0_43 = arith.constant 0 : index
      %c0_44 = arith.constant 0 : index
      %c0_45 = arith.constant 0 : index
      %66 = vector.load %arg5[%c0_43, %c0_44, %c0_45] : memref<2x32x256xf32, #tpu.memory_space<vmem>>, vector<2x32x256xf32>
      tpu.vector_store %arg5[%c0_43, %c0_44, %c0_45], %65 {strides = array<i32>} : memref<2x32x256xf32, #tpu.memory_space<vmem>>, vector<2x32x256xf32>,
    } else {
    }
    return
  }
  func.func @transform_0(%arg0: i32) -> (i32, i32, i32) {
    %c0_i32 = arith.constant 0 : i32
    %c0_i32_0 = arith.constant 0 : i32
    %c0_i32_1 = arith.constant 0 : i32
    return %arg0, %c0_i32, %c0_i32_0 : i32, i32, i32
  }
  func.func @transform_1(%arg0: i32) -> (i32, i32) {
    %c0_i32 = arith.constant 0 : i32
    %c0_i32_0 = arith.constant 0 : i32
    %c0_i32_1 = arith.constant 0 : i32
    return %c0_i32, %c0_i32_0 : i32, i32
  }
  func.func @transform_2(%arg0: i32) -> (i32, i32) {
    %c0_i32 = arith.constant 0 : i32
    %c0_i32_0 = arith.constant 0 : i32
    %c0_i32_1 = arith.constant 0 : i32
    return %c0_i32, %c0_i32_0 : i32, i32
  }
  func.func @transform_3(%arg0: i32) -> (i32, i32) {
    %c0_i32 = arith.constant 0 : i32
    %c0_i32_0 = arith.constant 0 : i32
    %c0_i32_1 = arith.constant 0 : i32
    return %c0_i32, %c0_i32_0 : i32, i32
  }
  func.func @transform_4(%arg0: i32) -> (i32, i32, i32) {
    %c0_i32 = arith.constant 0 : i32
    %c0_i32_0 = arith.constant 0 : i32
    %c0_i32_1 = arith.constant 0 : i32
    %c0_i32_2 = arith.constant 0 : i32
    return %c0_i32, %c0_i32_0, %c0_i32_1 : i32, i32, i32
  }
}

</mosaic_0001>

<llo_original>
// kernel: base_transpose_conv_block.1
$region0: #{base_transpose_conv_block.1}
  #allocation0 [shape = 'u32[]', space=smem, size = 0x4, offset = 0x4, fixed_abs, tag = 'smem constant byte address 0x4 - core index']
  #allocation1 [shape = 'u32[144,128]{1,0:T(1,128)}', space=vmem, size = 0x12000, scoped, tag = 'internal scratch']
  #allocation2 [shape = 'f32[32,1]{1,0:T(8,128)}', space=vmem, size = 0x4000, scoped, tag = 'scratch operand']
  #allocation3 [shape = 'f32[32,1]{1,0:T(8,128)}', space=vmem, size = 0x4000, scoped, tag = 'scratch operand']
  %s0 = inlined_call_operand.vmem [shape: bf16[2,16,256], index: 0, kind: input, shape index: {}]
  %s1 = inlined_call_operand.vmem [shape: bf16[32,16], index: 1, kind: input, shape index: {}]
  %s2 = inlined_call_operand.vmem [shape: f32[8,1], index: 2, kind: input, shape index: {}]
  %s3 = inlined_call_operand.vmem [shape: f32[8,1], index: 3, kind: input, shape index: {}]
  %s4 = inlined_call_operand.vmem [shape: f32[2,32,256], index: 4, kind: output, shape index: {}]
  %s5 = sld [smem:[#allocation0]]
  $region57: #{base_transpose_conv_block.1} parent=0
    _
  %s7 = ssub.s32 1, %s5
  %s8 = scalar_select 0, %s7, %s5
  loop: start=0, step=1, limit=4
  $region2: #{base_transpose_conv_block.1} parent=0 // loop_pre_header
    _
  $region3: #{base_transpose_conv_block.1} parent=0 // loop_header
    %s10 = sphi 0, %s14
    %p11 = scmp.ge.s32.totalorder %s10, 4
    %s20 = sphi 0, %s22
    %s23 = sphi 0, %s20
    %s24 = sphi 0, %s23
    %s40 = sphi 0, %s24
    %s44 = sphi 0, %s44
    %s46 = sphi 0, %s44
    %s47 = sphi 0, %s46
    %s61 = sphi 0, %s47
    %s65 = sphi 0, %s65
    %s67 = sphi 0, %s65
    %s68 = sphi 0, %s67
    %s82 = sphi 0, %s68
    %s86 = sphi 0, %s86
    %s88 = sphi 0, %s86
    %s89 = sphi 0, %s88
    %s103 = sphi 0, %s89
    %s107 = sphi 0, %s107
    %s109 = sphi 0, %s107
    %s110 = sphi 0, %s109
    %s124 = sphi 0, %s110
  $region4: #{base_transpose_conv_block.1} parent=0 // loop_header_branch
    %13 = sbr.rel (%p11) target = $region8
  $region5: #{base_transpose_conv_block.1} parent=0 // loop_body
    %s15 = ssub.s32 %s10, 1
    %s16 = ssub.s32 %s10, 2
    %s17 = sadd.s32 %s10, 1
    %s18 = ssub.s32 %s10, %s17
    %p19 = scmp.eq.s32.totalorder %s18, 0
    %s21 = sadd.s32 %s20, 1
    %s22 = scalar_select %p19, %s20, %s21
    %p25 = pneg %p19
    %p26 = scmp.eq.s32.totalorder %s10, 1
    %p27 = por %p25, %p26
    %p28 = scmp.ne.s32.totalorder %s20, %s23
    %p29 = scmp.eq.s32.totalorder %s10, 0
    %p30 = por %p28, %p29
    %p31 = scmp.ne.s32.totalorder %s20, %s23
    %p32 = scmp.eq.s32.totalorder %s15, 1
    %p33 = por %p31, %p32
    %p34 = scmp.ne.s32.totalorder %s23, %s24
    %p35 = scmp.eq.s32.totalorder %s15, 0
    %p36 = por %p34, %p35
    %p37 = scmp.ne.s32.totalorder %s23, %s24
    %p38 = scmp.eq.s32.totalorder %s16, 1
    %p39 = por %p37, %p38
    %p41 = scmp.ne.s32.totalorder %s24, %s40
    %p42 = scmp.eq.s32.totalorder %s16, 0
    %p43 = por %p41, %p42
    %s45 = sadd.s32 %s44, 1
    %p48 = scmp.eq.s32.totalorder %s10, 1
    %p49 = scmp.ne.s32.totalorder %s44, %s46
    %p50 = scmp.eq.s32.totalorder %s10, 0
    %p51 = por %p49, %p50
    %p52 = scmp.ne.s32.totalorder %s44, %s46
    %p53 = scmp.eq.s32.totalorder %s15, 1
    %p54 = por %p52, %p53
    %p55 = scmp.ne.s32.totalorder %s46, %s47
    %p56 = scmp.eq.s32.totalorder %s15, 0
    %p57 = por %p55, %p56
    %p58 = scmp.ne.s32.totalorder %s46, %s47
    %p59 = scmp.eq.s32.totalorder %s16, 1
    %p60 = por %p58, %p59
    %p62 = scmp.ne.s32.totalorder %s47, %s61
    %p63 = scmp.eq.s32.totalorder %s16, 0
    %p64 = por %p62, %p63
    %s66 = sadd.s32 %s65, 1
    %p69 = scmp.eq.s32.totalorder %s10, 1
    %p70 = scmp.ne.s32.totalorder %s65, %s67
    %p71 = scmp.eq.s32.totalorder %s10, 0
    %p72 = por %p70, %p71
    %p73 = scmp.ne.s32.totalorder %s65, %s67
    %p74 = scmp.eq.s32.totalorder %s15, 1
    %p75 = por %p73, %p74
    %p76 = scmp.ne.s32.totalorder %s67, %s68
    %p77 = scmp.eq.s32.totalorder %s15, 0
    %p78 = por %p76, %p77
    %p79 = scmp.ne.s32.totalorder %s67, %s68
    %p80 = scmp.eq.s32.totalorder %s16, 1
    %p81 = por %p79, %p80
    %p83 = scmp.ne.s32.totalorder %s68, %s82
    %p84 = scmp.eq.s32.totalorder %s16, 0
    %p85 = por %p83, %p84
    %s87 = sadd.s32 %s86, 1
    %p90 = scmp.eq.s32.totalorder %s10, 1
    %p91 = scmp.ne.s32.totalorder %s86, %s88
    %p92 = scmp.eq.s32.totalorder %s10, 0
    %p93 = por %p91, %p92
    %p94 = scmp.ne.s32.totalorder %s86, %s88
    %p95 = scmp.eq.s32.totalorder %s15, 1
    %p96 = por %p94, %p95
    %p97 = scmp.ne.s32.totalorder %s88, %s89
    %p98 = scmp.eq.s32.totalorder %s15, 0
    %p99 = por %p97, %p98
    %p100 = scmp.ne.s32.totalorder %s88, %s89
    %p101 = scmp.eq.s32.totalorder %s16, 1
    %p102 = por %p100, %p101
    %p104 = scmp.ne.s32.totalorder %s89, %s103
    %p105 = scmp.eq.s32.totalorder %s16, 0
    %p106 = por %p104, %p105
    %s108 = sadd.s32 %s107, 1
    %p111 = scmp.eq.s32.totalorder %s10, 1
    %p112 = scmp.ne.s32.totalorder %s107, %s109
    %p113 = scmp.eq.s32.totalorder %s10, 0
    %p114 = por %p112, %p113
    %p115 = scmp.ne.s32.totalorder %s107, %s109
    %p116 = scmp.eq.s32.totalorder %s15, 1
    %p117 = por %p115, %p116
    %p118 = scmp.ne.s32.totalorder %s109, %s110
    %p119 = scmp.eq.s32.totalorder %s15, 0
    %p120 = por %p118, %p119
    %p121 = scmp.ne.s32.totalorder %s109, %s110
    %p122 = scmp.eq.s32.totalorder %s16, 1
    %p123 = por %p121, %p122
    %p125 = scmp.ne.s32.totalorder %s110, %s124
    %p126 = scmp.eq.s32.totalorder %s16, 0
    %p127 = por %p125, %p126
    %p128 = scmp.le.s32.totalorder 1, %s10
    %p129 = scmp.lt.s32.totalorder %s10, 3
    %p130 = pnand %p128, %p129
    %p131 = pneg %p130
    // Predicated region
    $region9: #{base_transpose_conv_block.1} parent=5 // pred_check
      _
    $region10: #{base_transpose_conv_block.1} parent=5 // pred_check_branch
      %133 = sbr.rel (%p130) target = $region12
    $region11: #{base_transpose_conv_block.1} parent=5 // pred_region
      %s134 = ssub.s32 %s10, 1
      // Predicated region
      $region13: #{base_transpose_conv_block.1} parent=11 // pred_check
        %p135 = pneg %p57
      $region14: #{base_transpose_conv_block.1} parent=11 // pred_check_branch
        %137 = sbr.rel (%p135) target = $region16
      $region15: #{base_transpose_conv_block.1} parent=11 // pred_region
        _
      $region16: #{base_transpose_conv_block.1} parent=11 // pred_fallthru
        _
      // Predicated region
      $region17: #{base_transpose_conv_block.1} parent=11 // pred_check
        %p138 = pneg %p78
      $region18: #{base_transpose_conv_block.1} parent=11 // pred_check_branch
        %140 = sbr.rel (%p138) target = $region20
      $region19: #{base_transpose_conv_block.1} parent=11 // pred_region
        _
      $region20: #{base_transpose_conv_block.1} parent=11 // pred_fallthru
        _
      // Predicated region
      $region21: #{base_transpose_conv_block.1} parent=11 // pred_check
        %p141 = pneg %p99
      $region22: #{base_transpose_conv_block.1} parent=11 // pred_check_branch
        %143 = sbr.rel (%p141) target = $region24
      $region23: #{base_transpose_conv_block.1} parent=11 // pred_region
        _
      $region24: #{base_transpose_conv_block.1} parent=11 // pred_fallthru
        _
    $region12: #{base_transpose_conv_block.1} parent=5 // pred_fallthru
      _
    %p144 = scmp.lt.s32.totalorder %s10, 2
    // Predicated region
    $region25: #{base_transpose_conv_block.1} parent=5 // pred_check
      %p145 = pneg %p144
    $region26: #{base_transpose_conv_block.1} parent=5 // pred_check_branch
      %147 = sbr.rel (%p145) target = $region28
    $region27: #{base_transpose_conv_block.1} parent=5 // pred_region
      // Predicated region
      $region29: #{base_transpose_conv_block.1} parent=27 // pred_check
        %p148 = pneg %p30
      $region30: #{base_transpose_conv_block.1} parent=27 // pred_check_branch
        %150 = sbr.rel (%p148) target = $region32
      $region31: #{base_transpose_conv_block.1} parent=27 // pred_region
        %p151 = scmp.lt.s32.totalorder %s10, 1
        %s152 = scalar_select %p151, %s10, 1
        %s153 = smul.addr %s152, 4
        %s154 = smul.addr %s153, 4
        %s155 = scalar_lea.vmem %s0, %s154
      $region32: #{base_transpose_conv_block.1} parent=27 // pred_fallthru
        _
    $region28: #{base_transpose_conv_block.1} parent=5 // pred_fallthru
      _
    %p156 = scmp.le.s32.totalorder 1, %s10
    %p157 = scmp.lt.s32.totalorder %s10, 3
    %p158 = pnand %p156, %p157
    %p159 = pneg %p158
    // Predicated region
    $region33: #{base_transpose_conv_block.1} parent=5 // pred_check
      _
    $region34: #{base_transpose_conv_block.1} parent=5 // pred_check_branch
      %161 = sbr.rel (%p158) target = $region36
    $region35: #{base_transpose_conv_block.1} parent=5 // pred_region
      %s162 = ssub.s32 %s10, 1
      %p163 = scmp.lt.s32.totalorder %s15, 1
      %s164 = scalar_select %p163, %s15, 1
      %s165 = smul.addr %s164, 4
      %s166 = smul.addr %s165, 4
      %s167 = scalar_lea.vmem %s0, %s166
      %p168 = pneg %p36
      %p169 = pneg %p33
      %p170 = pneg %p57
      %p171 = pneg %p54
      %p172 = pneg %p78
      %p173 = pneg %p75
      %p174 = pneg %p99
      %p175 = pneg %p96
      %p176 = pneg %p120
      %p177 = pneg %p117
      %p178 = scmp.lt.s32.totalorder %s15, 1
      %s179 = scalar_select %p178, %s15, 1
      %s180 = smul.addr %s179, 4
      %s181 = smul.addr %s180, 4
      %s182 = scalar_lea.vmem %s0, %s181
      %p184 = scmp.eq.s32.totalorder %s15, 0
      // Predicated region
      $region37: #{base_transpose_conv_block.1} parent=35 // pred_check
        %p185 = pneg %p184
      $region38: #{base_transpose_conv_block.1} parent=35 // pred_check_branch
        %187 = sbr.rel (%p185) target = $region40
      $region39: #{base_transpose_conv_block.1} parent=35 // pred_region
        %vm188 = vcmask 7168
        %189 = vst.msk [vmem:[#allocation2] sm:$0xff] %vm188, 0.0
        %190 = vst.msk [vmem:[#allocation2 + $0x8] sm:$0xff] %vm188, 0.0
        %191 = vst.msk [vmem:[#allocation2 + $0x10] sm:$0xff] %vm188, 0.0
        %192 = vst.msk [vmem:[#allocation2 + $0x18] sm:$0xff] %vm188, 0.0
        %193 = vst.msk [vmem:[#allocation3] sm:$0xff] %vm188, 0.0
        %194 = vst.msk [vmem:[#allocation3 + $0x8] sm:$0xff] %vm188, 0.0
        %195 = vst.msk [vmem:[#allocation3 + $0x10] sm:$0xff] %vm188, 0.0
        %196 = vst.msk [vmem:[#allocation3 + $0x18] sm:$0xff] %vm188, 0.0
      $region40: #{base_transpose_conv_block.1} parent=35 // pred_fallthru
        _
      %v197 = vld [vmem:[%s1] sm:$0xf]
      %v198 = vld [vmem:[%s1 + $0x4] sm:$0xf]
      %v199 = vld [vmem:[%s1 + $0x8] sm:$0xf]
      %v200 = vld [vmem:[%s1 + $0xc] sm:$0xf]
      %v201 = vld [vmem:[%s182] sm:$0xff]
      %v202 = vld [vmem:[%s182 + $0x8] sm:$0xff]
      %v207 = vunpack.c.l.b16 %v197
      %v208 = vunpack.c.l.b16 %v198
      %v209 = vunpack.c.l.b16 %v199
      %v210 = vunpack.c.l.b16 %v200
      %v211 = vpack.c.b16 %v208, %v207
      %v212 = vpack.c.b16 %v210, %v209
      %v215 = vunpack.c.l.b16 %v201
      %v216 = vunpack.c.h.b16 %v201
      %v217 = vunpack.c.l.b16 %v202
      %v218 = vunpack.c.h.b16 %v202
      %v219 = vpack.c.b16 %v217, %v215
      %v220 = vpack.c.b16 %v218, %v216
      %vm223 = vcmask 130048
      %v225 = vsel %vm223, %v211, 0
      %v228 = vsel %vm223, %v212, 0
      %230 = vmatprep.subr.bf16.mxu0 0
      %231 = vmatpush1.bf16.msra.mxu0 0
      %232 = vmatprep.subr.bf16.mxu0 0
      %233 = vmatpush1.bf16.msra.mxu0 0
      %234 = vmatprep.subr.bf16.mxu0 0
      %235 = vmatpush1.bf16.msra.mxu0 0
      %236 = vmatprep.subr.bf16.mxu0 0
      %237 = vmatpush1.bf16.msra.mxu0 0
      %238 = vmatprep.subr.bf16.mxu0 0
      %239 = vmatpush1.bf16.msra.mxu0 0
      %240 = vmatprep.subr.bf16.mxu0 0
      %241 = vmatpush1.bf16.msra.mxu0 0
      %242 = vmatprep.subr.bf16.mxu0 0
      %243 = vmatpush1.bf16.msra.mxu0 0
      %244 = vmatprep.subr.bf16.mxu0 %v220
      %245 = vmatpush1.bf16.msra.mxu0 %v219
      %246 = vmatprep.subr.bf16.mxu0 0
      %247 = vmatpush2.bf16.msra.mxu0 0
      %248 = vmatprep.subr.bf16.mxu0 0
      %249 = vmatpush2.bf16.msra.mxu0 0
      %250 = vmatprep.subr.bf16.mxu0 0
      %251 = vmatpush2.bf16.msra.mxu0 0
      %252 = vmatprep.subr.bf16.mxu0 0
      %253 = vmatpush2.bf16.msra.mxu0 0
      %254 = vmatprep.subr.bf16.mxu0 0
      %255 = vmatpush2.bf16.msra.mxu0 0
      %256 = vmatprep.subr.bf16.mxu0 0
      %257 = vmatpush2.bf16.msra.mxu0 0
      %258 = vmatprep.subr.bf16.mxu0 0
      %259 = vmatpush2.bf16.msra.mxu0 0
      %260 = vmatprep.subr.bf16.mxu0 0
      %261 = vmatpush2.bf16.msra.mxu0 0
      %262 = vmatprep.mubr.bf16.mxu0 0
      %263 = vmatmul.mubr.bf16.gmra.mxu0 %v225
      %v264 = vpop.f32.mrf.mxu0
      %v265 = vadd.f32 0.0, %v264
      %v266 = vpop.f32.mrf.mxu0
      %v267 = vadd.f32 0.0, %v266
      %v268 = vpop.f32.mrf.mxu0
      %v269 = vadd.f32 0.0, %v268
      %v270 = vpop.f32.mrf.mxu0
      %v271 = vadd.f32 0.0, %v270
      %272 = vmatprep.mubr.bf16.mxu0 0
      %273 = vmatmul.mubr.bf16.gmra.mxu0 %v228
      %v274 = vpop.f32.mrf.mxu0
      %v275 = vadd.f32 0.0, %v274
      %v276 = vpop.f32.mrf.mxu0
      %v277 = vadd.f32 0.0, %v276
      %v278 = vpop.f32.mrf.mxu0
      %v279 = vadd.f32 0.0, %v278
      %v280 = vpop.f32.mrf.mxu0
      %v281 = vadd.f32 0.0, %v280
      %282 = vdwg.mxu0
      %s283 = smul.u32 %s15, 8
      %s284 = smul.addr %s283, 8
      %s285 = scalar_lea.vmem %s4, %s284
      %286 = vst [vmem:[%s285] sm:$0xff] %v265
      %287 = vst [vmem:[%s285 + $0x8] sm:$0xff] %v267
      %288 = vst [vmem:[%s285 + $0x10] sm:$0xff] %v269
      %289 = vst [vmem:[%s285 + $0x18] sm:$0xff] %v271
      %290 = vst [vmem:[%s285 + $0x20] sm:$0xff] %v275
      %291 = vst [vmem:[%s285 + $0x28] sm:$0xff] %v277
      %292 = vst [vmem:[%s285 + $0x30] sm:$0xff] %v279
      %293 = vst [vmem:[%s285 + $0x38] sm:$0xff] %v281
      %v294 = vld [vmem:[#allocation2] sm:$0xff]
      %v295 = vld [vmem:[#allocation2 + $0x8] sm:$0xff]
      %v296 = vld [vmem:[#allocation2 + $0x10] sm:$0xff]
      %v297 = vld [vmem:[#allocation2 + $0x18] sm:$0xff]
      %v298 = vadd.f32 %v265, %v267
      %299 = vadd.xlane.f32.xlu0 %v298
      %v300 = vpop.xlane.xlu0 %299
      %v301 = vadd.f32 %v269, %v271
      %302 = vadd.xlane.f32.xlu0 %v301
      %v303 = vpop.xlane.xlu0 %302
      %v304 = vadd.f32 %v275, %v277
      %305 = vadd.xlane.f32.xlu0 %v304
      %v306 = vpop.xlane.xlu0 %305
      %v307 = vadd.f32 %v279, %v281
      %308 = vadd.xlane.f32.xlu0 %v307
      %v309 = vpop.xlane.xlu0 %308
      %v310 = vadd.f32 %v294, %v300
      %v311 = vadd.f32 %v295, %v303
      %v312 = vadd.f32 %v296, %v306
      %v313 = vadd.f32 %v297, %v309
      %vm314 = vcmask 7168
      %315 = vst.msk [vmem:[#allocation2] sm:$0xff] %vm314, %v310
      %316 = vst.msk [vmem:[#allocation2 + $0x8] sm:$0xff] %vm314, %v311
      %317 = vst.msk [vmem:[#allocation2 + $0x10] sm:$0xff] %vm314, %v312
      %318 = vst.msk [vmem:[#allocation2 + $0x18] sm:$0xff] %vm314, %v313
      %v319 = vld [vmem:[#allocation3] sm:$0xff]
      %v320 = vld [vmem:[#allocation3 + $0x8] sm:$0xff]
      %v321 = vld [vmem:[#allocation3 + $0x10] sm:$0xff]
      %v322 = vld [vmem:[#allocation3 + $0x18] sm:$0xff]
      %v323 = vmul.f32 %v265, %v265
      %v324 = vmul.f32 %v267, %v267
      %v325 = vmul.f32 %v269, %v269
      %v326 = vmul.f32 %v271, %v271
      %v327 = vmul.f32 %v275, %v275
      %v328 = vmul.f32 %v277, %v277
      %v329 = vmul.f32 %v279, %v279
      %v330 = vmul.f32 %v281, %v281
      %v331 = vadd.f32 %v323, %v324
      %332 = vadd.xlane.f32.xlu0 %v331
      %v333 = vpop.xlane.xlu0 %332
      %v334 = vadd.f32 %v325, %v326
      %335 = vadd.xlane.f32.xlu0 %v334
      %v336 = vpop.xlane.xlu0 %335
      %v337 = vadd.f32 %v327, %v328
      %338 = vadd.xlane.f32.xlu0 %v337
      %v339 = vpop.xlane.xlu0 %338
      %v340 = vadd.f32 %v329, %v330
      %341 = vadd.xlane.f32.xlu0 %v340
      %v342 = vpop.xlane.xlu0 %341
      %v343 = vadd.f32 %v319, %v333
      %v344 = vadd.f32 %v320, %v336
      %v345 = vadd.f32 %v321, %v339
      %v346 = vadd.f32 %v322, %v342
      %347 = vst.msk [vmem:[#allocation3] sm:$0xff] %vm314, %v343
      %348 = vst.msk [vmem:[#allocation3 + $0x8] sm:$0xff] %vm314, %v344
      %349 = vst.msk [vmem:[#allocation3 + $0x10] sm:$0xff] %vm314, %v345
      %350 = vst.msk [vmem:[#allocation3 + $0x18] sm:$0xff] %vm314, %v346
      %p351 = scmp.eq.s32.totalorder %s15, 1
      // Predicated region
      $region41: #{base_transpose_conv_block.1} parent=35 // pred_check
        %p352 = pneg %p351
      $region42: #{base_transpose_conv_block.1} parent=35 // pred_check_branch
        %354 = sbr.rel (%p352) target = $region44
      $region43: #{base_transpose_conv_block.1} parent=35 // pred_region
        %v355 = vld [vmem:[#allocation2] sm:$0xff]
        %v356 = vld [vmem:[#allocation3] sm:$0xff]
        %v357 = vld [vmem:[#allocation2 + $0x8] sm:$0xff]
        %v358 = vadd.f32 %v355, %v357
        %v359 = vld [vmem:[#allocation3 + $0x8] sm:$0xff]
        %v360 = vadd.f32 %v356, %v359
        %v361 = vld [vmem:[#allocation2 + $0x10] sm:$0xff]
        %v362 = vadd.f32 %v358, %v361
        %v363 = vld [vmem:[#allocation3 + $0x10] sm:$0xff]
        %v364 = vadd.f32 %v360, %v363
        %v365 = vld [vmem:[#allocation2 + $0x18] sm:$0xff]
        %v366 = vadd.f32 %v362, %v365
        %v367 = vld [vmem:[#allocation3 + $0x18] sm:$0xff]
        %v368 = vadd.f32 %v364, %v367
        %v369 = vmul.f32 %v366, 0.00048828125
        %v370 = vmul.f32 %v368, 0.00048828125
        %v371 = vmul.f32 %v369, %v369
        %v372 = vsub.f32 %v370, %v371
        %v373 = vmax.f32 %v372, 0.0
        %v374 = vld [vmem:[%s2] sm:$0xff]
        %v375 = vadd.f32 %v373, 1e-05
        %v376 = vrsqrt.pop %v375
        %v377 = vmul.f32 %v374, %v376
        %v378 = vld [vmem:[%s3] sm:$0xff]
        %v379 = vmul.f32 %v369, %v377
        %v380 = vsub.f32 %v378, %v379
        %v381 = vld [vmem:[%s4] sm:$0xff]
        %v382 = vld [vmem:[%s4 + $0x8] sm:$0xff]
        %v383 = vld [vmem:[%s4 + $0x10] sm:$0xff]
        %v384 = vld [vmem:[%s4 + $0x18] sm:$0xff]
        %v385 = vld [vmem:[%s4 + $0x20] sm:$0xff]
        %v386 = vld [vmem:[%s4 + $0x28] sm:$0xff]
        %v387 = vld [vmem:[%s4 + $0x30] sm:$0xff]
        %v388 = vld [vmem:[%s4 + $0x38] sm:$0xff]
        %v389 = vld [vmem:[%s4 + $0x40] sm:$0xff]
        %v390 = vld [vmem:[%s4 + $0x48] sm:$0xff]
        %v391 = vld [vmem:[%s4 + $0x50] sm:$0xff]
        %v392 = vld [vmem:[%s4 + $0x58] sm:$0xff]
        %v393 = vld [vmem:[%s4 + $0x60] sm:$0xff]
        %v394 = vld [vmem:[%s4 + $0x68] sm:$0xff]
        %v395 = vld [vmem:[%s4 + $0x70] sm:$0xff]
        %v396 = vld [vmem:[%s4 + $0x78] sm:$0xff]
        %398 = vset.pattern.permute.xlu0 0
        %399 = vperm.xlu0 %398, %v377
        %v400 = vpop.permute.xlu0 %399
        %v402 = vmul.f32 %v381, %v400
        %v403 = vmul.f32 %v382, %v400
        %v404 = vmul.f32 %v383, %v400
        %v405 = vmul.f32 %v384, %v400
        %v406 = vmul.f32 %v385, %v400
        %v407 = vmul.f32 %v386, %v400
        %v408 = vmul.f32 %v387, %v400
        %v409 = vmul.f32 %v388, %v400
        %v410 = vmul.f32 %v389, %v400
        %v411 = vmul.f32 %v390, %v400
        %v412 = vmul.f32 %v391, %v400
        %v413 = vmul.f32 %v392, %v400
        %v414 = vmul.f32 %v393, %v400
        %v415 = vmul.f32 %v394, %v400
        %v416 = vmul.f32 %v395, %v400
        %v417 = vmul.f32 %v396, %v400
        %419 = vset.pattern.permute.xlu0 0
        %420 = vperm.xlu0 %419, %v380
        %v421 = vpop.permute.xlu0 %420
        %v423 = vadd.f32 %v402, %v421
        %v424 = vadd.f32 %v403, %v421
        %v425 = vadd.f32 %v404, %v421
        %v426 = vadd.f32 %v405, %v421
        %v427 = vadd.f32 %v406, %v421
        %v428 = vadd.f32 %v407, %v421
        %v429 = vadd.f32 %v408, %v421
        %v430 = vadd.f32 %v409, %v421
        %v431 = vadd.f32 %v410, %v421
        %v432 = vadd.f32 %v411, %v421
        %v433 = vadd.f32 %v412, %v421
        %v434 = vadd.f32 %v413, %v421
        %v435 = vadd.f32 %v414, %v421
        %v436 = vadd.f32 %v415, %v421
        %v437 = vadd.f32 %v416, %v421
        %v438 = vadd.f32 %v417, %v421
        %v439 = vmax.f32 %v423, 0.0
        %v440 = vmax.f32 %v424, 0.0
        %v441 = vmax.f32 %v425, 0.0
        %v442 = vmax.f32 %v426, 0.0
        %v443 = vmax.f32 %v427, 0.0
        %v444 = vmax.f32 %v428, 0.0
        %v445 = vmax.f32 %v429, 0.0
        %v446 = vmax.f32 %v430, 0.0
        %v447 = vmax.f32 %v431, 0.0
        %v448 = vmax.f32 %v432, 0.0
        %v449 = vmax.f32 %v433, 0.0
        %v450 = vmax.f32 %v434, 0.0
        %v451 = vmax.f32 %v435, 0.0
        %v452 = vmax.f32 %v436, 0.0
        %v453 = vmax.f32 %v437, 0.0
        %v454 = vmax.f32 %v438, 0.0
        %455 = vst [vmem:[%s4] sm:$0xff] %v439
        %456 = vst [vmem:[%s4 + $0x8] sm:$0xff] %v440
        %457 = vst [vmem:[%s4 + $0x10] sm:$0xff] %v441
        %458 = vst [vmem:[%s4 + $0x18] sm:$0xff] %v442
        %459 = vst [vmem:[%s4 + $0x20] sm:$0xff] %v443
        %460 = vst [vmem:[%s4 + $0x28] sm:$0xff] %v444
        %461 = vst [vmem:[%s4 + $0x30] sm:$0xff] %v445
        %462 = vst [vmem:[%s4 + $0x38] sm:$0xff] %v446
        %463 = vst [vmem:[%s4 + $0x40] sm:$0xff] %v447
        %464 = vst [vmem:[%s4 + $0x48] sm:$0xff] %v448
        %465 = vst [vmem:[%s4 + $0x50] sm:$0xff] %v449
        %466 = vst [vmem:[%s4 + $0x58] sm:$0xff] %v450
        %467 = vst [vmem:[%s4 + $0x60] sm:$0xff] %v451
        %468 = vst [vmem:[%s4 + $0x68] sm:$0xff] %v452
        %469 = vst [vmem:[%s4 + $0x70] sm:$0xff] %v453
        %470 = vst [vmem:[%s4 + $0x78] sm:$0xff] %v454
      $region44: #{base_transpose_conv_block.1} parent=35 // pred_fallthru
        _
      // Predicated region
      $region45: #{base_transpose_conv_block.1} parent=35 // pred_check
        %p471 = pneg %p117
      $region46: #{base_transpose_conv_block.1} parent=35 // pred_check_branch
        %473 = sbr.rel (%p471) target = $region48
      $region47: #{base_transpose_conv_block.1} parent=35 // pred_region
        _
      $region48: #{base_transpose_conv_block.1} parent=35 // pred_fallthru
        _
      // Predicated region
      $region49: #{base_transpose_conv_block.1} parent=35 // pred_check
        %p474 = pneg %p117
      $region50: #{base_transpose_conv_block.1} parent=35 // pred_check_branch
        %476 = sbr.rel (%p474) target = $region52
      $region51: #{base_transpose_conv_block.1} parent=35 // pred_region
        _
      $region52: #{base_transpose_conv_block.1} parent=35 // pred_fallthru
        _
    $region36: #{base_transpose_conv_block.1} parent=5 // pred_fallthru
      _
    %p477 = scmp.le.s32.totalorder 2, %s10
    // Predicated region
    $region53: #{base_transpose_conv_block.1} parent=5 // pred_check
      %p478 = pneg %p477
    $region54: #{base_transpose_conv_block.1} parent=5 // pred_check_branch
      %480 = sbr.rel (%p478) target = $region56
    $region55: #{base_transpose_conv_block.1} parent=5 // pred_region
      %s481 = ssub.s32 %s10, 2
    $region56: #{base_transpose_conv_block.1} parent=5 // pred_fallthru
      _
  $region6: #{base_transpose_conv_block.1} parent=0 // loop_footer
    %s14 = sadd.s32 1, %s10
  $region7: #{base_transpose_conv_block.1} parent=0 // loop_footer_branch
    %9 = sbr.rel target = $region3
  $region8: #{base_transpose_conv_block.1} parent=0 // loop_exit
    _

</llo_original>
